<compile_context>
chip_gen: v6e
topology: v6e:2x2x1
jax: 0.10.0
libtpu: 0.0.40
codegen_flags: <defaults>
</compile_context>

<pallas_src>
import jax
import jax.numpy as jnp
from jax import lax
from jax.experimental import pallas as pl
from jax.experimental.pallas import tpu as pltpu

_MIB = 1024 * 1024


def _round_down_mult(x, m):
    return (x // m) * m


def _round_up_mult(x, m):
    return ((x + m - 1) // m) * m


# ----------------------------------------------------------------------------
# Resident path: whole (b_tile, D) row block in VMEM, single fused kernel.
# ----------------------------------------------------------------------------
def _resident_kernel(eps, inv_n):
    def kernel(x_ref, w_ref, b_ref, o_ref):
        # x_ref: (b_tile, D). f32 accumulation; for f32 inputs the astype is a
        # no-op, for bf16 the elementwise chain promotes per-vreg.
        xf = x_ref[...].astype(jnp.float32)
        mean = jnp.sum(xf, axis=-1, keepdims=True) * inv_n          # (b, 1)
        xc = xf - mean
        # Centered (two-pass) variance: the tile is resident in VMEM, so the
        # second walk is VMEM-only and avoids E[x^2]-mean^2 cancellation.
        var = jnp.sum(xc * xc, axis=-1, keepdims=True) * inv_n      # (b, 1)
        rstd = lax.rsqrt(var + eps)
        # Per-channel affine as a (1, D) row broadcast.
        o_ref[...] = (xc * rstd * w_ref[...] + b_ref[...]).astype(o_ref.dtype)

    return kernel


def _layernorm_resident(x2, w_row, b_row, eps, N, D, row_bytes, budget, vmem_cap):
    if N < 8:
        # Sublane dim of a block must be a multiple of 8 or equal the full dim.
        b_tile = N
    else:
        n8 = _round_up_mult(N, 8)
        # Largest legal row block that fits the per-block budget.
        b_fit = max(8, min(n8, _round_down_mult(budget // row_bytes, 8)))
        # Keep >= ~2-4 grid steps when the batch allows, so DMA/compute
        # pipeline and (on v7x) both TensorCores get work.
        if N >= 32:
            steps = 4
        elif N >= 16:
            steps = 2
        else:
            steps = 1
        b_pipe = max(8, _round_down_mult(N // steps, 8))
        b_tile = min(b_fit, b_pipe)

    grid = (pl.cdiv(N, b_tile),)

    block_bytes = b_tile * row_bytes
    f32_block = b_tile * D * 4
    # 2x in (double-buffered) + 2x out + in-kernel f32 temps + headroom.
    vmem_limit = 4 * block_bytes + int(1.5 * f32_block) + 2 * _MIB
    vmem_limit = int(min(max(vmem_limit, 16 * _MIB), int(vmem_cap * 0.9)))

    return pl.pallas_call(
        _resident_kernel(eps, 1.0 / float(D)),
        out_shape=jax.ShapeDtypeStruct((N, D), x2.dtype),
        grid_spec=pltpu.PrefetchScalarGridSpec(
            num_scalar_prefetch=0,
            grid=grid,
            in_specs=[
                pl.BlockSpec((b_tile, D), lambda n: (n, 0)),
                pl.BlockSpec((1, D), lambda n: (0, 0)),   # weight row, fetched once
                pl.BlockSpec((1, D), lambda n: (0, 0)),   # bias row, fetched once
            ],
            out_specs=pl.BlockSpec((b_tile, D), lambda n: (n, 0)),
        ),
        compiler_params=pltpu.CompilerParams(
            dimension_semantics=("parallel",),
            vmem_limit_bytes=vmem_limit,
        ),
    )(x2, w_row, b_row)


# ----------------------------------------------------------------------------
# Chunked fallback: sample too large to keep resident (e.g. v7x 64 MiB VMEM).
# Pass 1: per-sample sum / sumsq accumulated over column chunks -> mean, rstd.
# Pass 2: elementwise normalize + affine.
# ----------------------------------------------------------------------------
def _stats_kernel(eps, inv_n, col_tile, d_valid, need_mask):
    def kernel(x_ref, mean_ref, rstd_ref, s1_ref, s2_ref):
        j = pl.program_id(1)

        @pl.when(j == 0)
        def _():
            s1_ref[...] = jnp.zeros_like(s1_ref)
            s2_ref[...] = jnp.zeros_like(s2_ref)

        xf = x_ref[...].astype(jnp.float32)
        if need_mask:
            # Mask the out-of-bounds tail of the last column chunk.
            col = j * col_tile + lax.broadcasted_iota(jnp.int32, xf.shape, 1)
            xf = jnp.where(col < d_valid, xf, 0.0)

        s1_ref[...] = s1_ref[...] + jnp.sum(xf, axis=-1, keepdims=True)
        s2_ref[...] = s2_ref[...] + jnp.sum(xf * xf, axis=-1, keepdims=True)

        @pl.when(j == pl.num_programs(1) - 1)
        def _():
            mean = s1_ref[...] * inv_n
            # Single-pass variance here (second HBM pass would be needed for a
            # centered form); clamp guards tiny negative round-off.
            var = jnp.maximum(s2_ref[...] * inv_n - mean * mean, 0.0)
            mean_ref[...] = mean
            rstd_ref[...] = lax.rsqrt(var + eps)

    return kernel


def _apply_kernel(x_ref, mean_ref, rstd_ref, w_ref, b_ref, o_ref):
    xf = x_ref[...].astype(jnp.float32)
    xn = (xf - mean_ref[...]) * rstd_ref[...]
    o_ref[...] = (xn * w_ref[...] + b_ref[...]).astype(o_ref.dtype)


def _layernorm_chunked(x2, w_row, b_row, eps, N, D, itemsize, budget, vmem_cap,
                       col_tile_override=None):
    b_tile = N if N < 8 else 8
    col_fit = max(128, _round_down_mult(budget // (b_tile * itemsize), 128))
    col_tile = min(col_fit, _round_up_mult(D, 128))
    if col_tile_override is not None:
        col_tile = min(col_tile, int(col_tile_override))
    n_rows = pl.cdiv(N, b_tile)
    n_cols = pl.cdiv(D, col_tile)
    need_mask = (D % col_tile) != 0

    block_bytes = b_tile * col_tile * itemsize
    vmem_limit = 4 * block_bytes + int(1.5 * b_tile * col_tile * 4) + 2 * _MIB
    vmem_limit = int(min(max(vmem_limit, 16 * _MIB), int(vmem_cap * 0.9)))

    mean, rstd = pl.pallas_call(
        _stats_kernel(eps, 1.0 / float(D), col_tile, D, need_mask),
        out_shape=(
            jax.ShapeDtypeStruct((N, 1), jnp.float32),
            jax.ShapeDtypeStruct((N, 1), jnp.float32),
        ),
        grid_spec=pltpu.PrefetchScalarGridSpec(
            num_scalar_prefetch=0,
            grid=(n_rows, n_cols),
            in_specs=[pl.BlockSpec((b_tile, col_tile), lambda i, j: (i, j))],
            out_specs=[
                pl.BlockSpec((b_tile, 1), lambda i, j: (i, 0)),
                pl.BlockSpec((b_tile, 1), lambda i, j: (i, 0)),
            ],
            scratch_shapes=[
                pltpu.VMEM((b_tile, 1), jnp.float32),
                pltpu.VMEM((b_tile, 1), jnp.float32),
            ],
        ),
        compiler_params=pltpu.CompilerParams(
            dimension_semantics=("parallel", "arbitrary"),
            vmem_limit_bytes=vmem_limit,
        ),
    )(x2)

    out2 = pl.pallas_call(
        _apply_kernel,
        out_shape=jax.ShapeDtypeStruct((N, D), x2.dtype),
        grid_spec=pltpu.PrefetchScalarGridSpec(
            num_scalar_prefetch=0,
            grid=(n_rows, n_cols),
            in_specs=[
                pl.BlockSpec((b_tile, col_tile), lambda i, j: (i, j)),
                pl.BlockSpec((b_tile, 1), lambda i, j: (i, 0)),
                pl.BlockSpec((b_tile, 1), lambda i, j: (i, 0)),
                pl.BlockSpec((1, col_tile), lambda i, j: (0, j)),
                pl.BlockSpec((1, col_tile), lambda i, j: (0, j)),
            ],
            out_specs=pl.BlockSpec((b_tile, col_tile), lambda i, j: (i, j)),
        ),
        compiler_params=pltpu.CompilerParams(
            dimension_semantics=("parallel", "parallel"),
            vmem_limit_bytes=vmem_limit,
        ),
    )(x2, mean, rstd, w_row, b_row)
    return out2


# ----------------------------------------------------------------------------
# Public wrapper.
# ----------------------------------------------------------------------------
def simple_feature_processor(x, weight, bias, eps=1e-5,
                             force_chunked=False, _col_tile=None):
    """x: (N, C, H, W); weight, bias: per-channel params with C elements."""
    N, C, H, W = x.shape
    D = C * H * W
    itemsize = jnp.dtype(x.dtype).itemsize

    x2 = x.reshape(N, D)
    # Tiny (1, D) affine rows (one-time O(C*H*W) wrapper cost, fetched once by
    # a constant index_map).
    w_row = jnp.broadcast_to(
        jnp.asarray(weight, jnp.float32).reshape(C, 1), (C, H * W)).reshape(1, D)
    b_row = jnp.broadcast_to(
        jnp.asarray(bias, jnp.float32).reshape(C, 1), (C, H * W)).reshape(1, D)

    # Generation-aware VMEM budget (v7x has 64 MiB per TensorCore).
    try:
        vmem_cap = int(pltpu.get_tpu_info().vmem_capacity_bytes)
    except Exception:
        vmem_cap = 128 * _MIB
    small_vmem = vmem_cap <= 64 * _MIB
    budget = (5 * _MIB) if small_vmem else (14 * _MIB)
    hard_cap = vmem_cap // 8   # 2*in + 2*out + f32 temps must stay well inside

    row_bytes = D * itemsize
    min_rows = N if N < 8 else 8

    if (not force_chunked) and (min_rows * row_bytes <= hard_cap):
        out2 = _layernorm_resident(x2, w_row, b_row, eps, N, D, row_bytes,
                                   budget, vmem_cap)
    else:
        out2 = _layernorm_chunked(x2, w_row, b_row, eps, N, D, itemsize,
                                  budget, vmem_cap, col_tile_override=_col_tile)
    return out2.reshape(N, C, H, W)


def _reference(x, weight, bias, eps=1e-5):
    mean = jnp.mean(x, axis=(1, 2, 3), keepdims=True)
    var = jnp.mean((x - mean) ** 2, axis=(1, 2, 3), keepdims=True)
    normalized = (x - mean) / jnp.sqrt(var + eps)
    w = jnp.asarray(weight).reshape(1, -1, 1, 1)
    b = jnp.asarray(bias).reshape(1, -1, 1, 1)
    return w * normalized + b


if __name__ == "__main__":
    k0, k1, k2, k3 = jax.random.split(jax.random.PRNGKey(0), 4)

    # --- main (resident) path, shapes implied by the module ---
    N, C, H, W = 2, 4, 16, 16
    x = jax.random.normal(k0, (N, C, H, W), dtype=jnp.float32)
    weight = jnp.ones((C,), dtype=jnp.float32)   # nn.Parameter(torch.ones)
    bias = jnp.zeros((C,), dtype=jnp.float32)    # nn.Parameter(torch.zeros)

    out = simple_feature_processor(x, weight, bias)
    out = jax.block_until_ready(out)
    ref = _reference(x, weight, bias)
    assert out.shape == (N, C, H, W)
    assert jnp.allclose(out, ref, atol=1e-5, rtol=1e-5)

    # --- chunked fallback path (forced, small col tile to cover the masked
    # tail reduction), with non-trivial affine parameters ---
    N2, C2, H2, W2 = 4, 3, 10, 10
    x_b = jax.random.normal(k1, (N2, C2, H2, W2), dtype=jnp.float32)
    w_b = jax.random.normal(k2, (C2,), dtype=jnp.float32)
    b_b = jax.random.normal(k3, (C2,), dtype=jnp.float32)
    out_b = simple_feature_processor(x_b, w_b, b_b,
                                     force_chunked=True, _col_tile=128)
    out_b = jax.block_until_ready(out_b)
    ref_b = _reference(x_b, w_b, b_b)
    assert jnp.allclose(out_b, ref_b, atol=1e-4, rtol=1e-4)

    print("KERNEL_OK")
</pallas_src>

<mosaic_0001>
module attributes {stable_mosaic.version = 11 : i64} {
  func.func @kernel(%arg0: i32, %arg1: memref<2x1024xf32, #tpu.memory_space<vmem>>, %arg2: memref<1x1024xf32, #tpu.memory_space<vmem>>, %arg3: memref<1x1024xf32, #tpu.memory_space<vmem>>, %arg4: memref<2x1024xf32, #tpu.memory_space<vmem>>) attributes {dimension_semantics = [#tpu.dimension_semantics<parallel>], iteration_bounds = array<i64: 1>, scalar_prefetch = 0 : i64, scratch_operands = 0 : i64, tpu.core_type = #tpu.core_type<tc>, window_params = [{transform_indices = @transform_0, window_bounds = array<i64: 2, 1024>}, {pipeline_mode = #tpu.pipeline_mode<synchronous>, transform_indices = @transform_1, window_bounds = array<i64: 1, 1024>}, {pipeline_mode = #tpu.pipeline_mode<synchronous>, transform_indices = @transform_2, window_bounds = array<i64: 1, 1024>}, {transform_indices = @transform_3, window_bounds = array<i64: 2, 1024>}]} {
    %c0 = arith.constant 0 : index
    %c0_0 = arith.constant 0 : index
    %0 = vector.load %arg1[%c0, %c0_0] : memref<2x1024xf32, #tpu.memory_space<vmem>>, vector<2x1024xf32>
    %cst = arith.constant dense<0.000000e+00> : vector<2xf32>
    %1 = vector.multi_reduction <add>, %0, %cst [1] : vector<2x1024xf32> to vector<2xf32>
    %2 = vector.shape_cast %1 : vector<2xf32> to vector<2x1xf32>
    %cst_1 = arith.constant 9.765625E-4 : f32
    %3 = vector.broadcast %cst_1 : f32 to vector<2x1xf32>
    %4 = arith.mulf %2, %3 : vector<2x1xf32>
    %5 = vector.broadcast %4 : vector<2x1xf32> to vector<2x1024xf32>
    %6 = arith.subf %0, %5 : vector<2x1024xf32>
    %7 = arith.mulf %6, %6 : vector<2x1024xf32>
    %cst_2 = arith.constant dense<0.000000e+00> : vector<2xf32>
    %8 = vector.multi_reduction <add>, %7, %cst_2 [1] : vector<2x1024xf32> to vector<2xf32>
    %9 = vector.shape_cast %8 : vector<2xf32> to vector<2x1xf32>
    %cst_3 = arith.constant 9.765625E-4 : f32
    %10 = vector.broadcast %cst_3 : f32 to vector<2x1xf32>
    %11 = arith.mulf %9, %10 : vector<2x1xf32>
    %cst_4 = arith.constant 9.99999974E-6 : f32
    %12 = vector.broadcast %cst_4 : f32 to vector<2x1xf32>
    %13 = arith.addf %11, %12 : vector<2x1xf32>
    %14 = math.rsqrt %13 : vector<2x1xf32>
    %15 = vector.broadcast %14 : vector<2x1xf32> to vector<2x1024xf32>
    %16 = arith.mulf %6, %15 : vector<2x1024xf32>
    %c0_5 = arith.constant 0 : index
    %c0_6 = arith.constant 0 : index
    %17 = vector.load %arg2[%c0_5, %c0_6] : memref<1x1024xf32, #tpu.memory_space<vmem>>, vector<1x1024xf32>
    %18 = vector.broadcast %17 : vector<1x1024xf32> to vector<2x1024xf32>
    %19 = arith.mulf %16, %18 : vector<2x1024xf32>
    %c0_7 = arith.constant 0 : index
    %c0_8 = arith.constant 0 : index
    %20 = vector.load %arg3[%c0_7, %c0_8] : memref<1x1024xf32, #tpu.memory_space<vmem>>, vector<1x1024xf32>
    %21 = vector.broadcast %20 : vector<1x1024xf32> to vector<2x1024xf32>
    %22 = arith.addf %19, %21 : vector<2x1024xf32>
    %c0_9 = arith.constant 0 : index
    %c0_10 = arith.constant 0 : index
    %23 = vector.load %arg4[%c0_9, %c0_10] : memref<2x1024xf32, #tpu.memory_space<vmem>>, vector<2x1024xf32>
    tpu.vector_store %arg4[%c0_9, %c0_10], %22 {strides = array<i32>} : memref<2x1024xf32, #tpu.memory_space<vmem>>, vector<2x1024xf32>,
    return
  }
  func.func @transform_0(%arg0: i32) -> (i32, i32) {
    %c0_i32 = arith.constant 0 : i32
    %c0_i32_0 = arith.constant 0 : i32
    return %arg0, %c0_i32 : i32, i32
  }
  func.func @transform_1(%arg0: i32) -> (i32, i32) {
    %c0_i32 = arith.constant 0 : i32
    %c0_i32_0 = arith.constant 0 : i32
    %c0_i32_1 = arith.constant 0 : i32
    return %c0_i32, %c0_i32_0 : i32, i32
  }
  func.func @transform_2(%arg0: i32) -> (i32, i32) {
    %c0_i32 = arith.constant 0 : i32
    %c0_i32_0 = arith.constant 0 : i32
    %c0_i32_1 = arith.constant 0 : i32
    return %c0_i32, %c0_i32_0 : i32, i32
  }
  func.func @transform_3(%arg0: i32) -> (i32, i32) {
    %c0_i32 = arith.constant 0 : i32
    %c0_i32_0 = arith.constant 0 : i32
    return %arg0, %c0_i32 : i32, i32
  }
}

</mosaic_0001>

<llo_original>
// kernel: tpu_custom_call.1
$region0: #{tpu_custom_call.1}
  #allocation0 [shape = 'u32[]', space=smem, size = 0x4, offset = 0x4, fixed_abs, tag = 'smem constant byte address 0x4 - core index']
  #allocation1 [shape = 'u32[144,128]{1,0:T(1,128)}', space=vmem, size = 0x12000, scoped, tag = 'internal scratch']
  %s0 = inlined_call_operand.hbm [shape: f32[2,1024], index: 0, kind: input, shape index: {}]
  %s1 = inlined_call_operand.hbm [shape: f32[1,1024], index: 1, kind: input, shape index: {}]
  %s2 = inlined_call_operand.hbm [shape: f32[1,1024], index: 2, kind: input, shape index: {}]
  %s3 = inlined_call_operand.hbm [shape: f32[2,1024], index: 3, kind: output, shape index: {}]
  %s4 = sld [smem:[#allocation0]]
  $region34: #{tpu_custom_call.1} parent=0
    _
  %s6 = ssub.s32 1, %s4
  %s7 = scalar_select 0, %s6, %s4
  $region1: #{tpu_custom_call.1} parent=0
    #allocation2 [shape = 'u8[8192]{0}', space=vmem, size = 0x2000, scoped, tag = 'input window, operand 0, single buffered']
    #allocation3 [shape = 's32[1]{0}', space=sflag, size = 0x4, scoped, tag = 'scoped memory for tpu_custom_call.1']
    #allocation4 [shape = 's32[1]{0}', space=sflag, size = 0x4, scoped, tag = 'scoped memory for tpu_custom_call.1']
    #allocation5 [shape = 'u8[4096]{0}', space=vmem, size = 0x1000, scoped, tag = 'input window, operand 1, single buffered']
    #allocation6 [shape = 's32[1]{0}', space=sflag, size = 0x4, scoped, tag = 'scoped memory for tpu_custom_call.1']
    #allocation7 [shape = 'u8[4096]{0}', space=vmem, size = 0x1000, scoped, tag = 'input window, operand 2, single buffered']
    #allocation8 [shape = 'u8[8192]{0}', space=vmem, size = 0x2000, scoped, tag = 'output window, operand 0, single buffered']
    %8 = vsyncpa [#allocation3], 0
    %9 = vsyncpa [#allocation6], 0
    %10 = vsyncpa [#allocation4], 0
    // Predicated region
    $region2: #{tpu_custom_call.1} parent=1 // pred_check
      _
    $region3: #{tpu_custom_call.1} parent=1 // pred_check_branch
      %12 = sbr.rel (0) target = $region5
    $region4: #{tpu_custom_call.1} parent=1 // pred_region
      %s14 = ssub.s32 256, 256
      %15 = vsyncadd [#allocation3], %s14
      %s17 = sshll.u32 [#allocation2], 4
      %s18 = int_to_ptr.vmem [resolvable:$true] %s17
      %20 = dma.hbm_to_vmem [thread:$0]  %s0, 256, %s18, [#allocation3]
    $region5: #{tpu_custom_call.1} parent=1 // pred_fallthru
      _
    // Predicated region
    $region6: #{tpu_custom_call.1} parent=1 // pred_check
      _
    $region7: #{tpu_custom_call.1} parent=1 // pred_check_branch
      %22 = sbr.rel (0) target = $region9
    $region8: #{tpu_custom_call.1} parent=1 // pred_region
      %s24 = ssub.s32 128, 128
      %25 = vsyncadd [#allocation6], %s24
      %s27 = sshll.u32 [#allocation5], 4
      %s28 = int_to_ptr.vmem [resolvable:$true] %s27
      %30 = dma.hbm_to_vmem [thread:$0]  %s1, 128, %s28, [#allocation6]
    $region9: #{tpu_custom_call.1} parent=1 // pred_fallthru
      _
    // Predicated region
    $region10: #{tpu_custom_call.1} parent=1 // pred_check
      _
    $region11: #{tpu_custom_call.1} parent=1 // pred_check_branch
      %32 = sbr.rel (0) target = $region13
    $region12: #{tpu_custom_call.1} parent=1 // pred_region
      %s34 = ssub.s32 128, 128
      %35 = vsyncadd [#allocation6], %s34
      %s37 = sshll.u32 [#allocation7], 4
      %s38 = int_to_ptr.vmem [resolvable:$true] %s37
      %40 = dma.hbm_to_vmem [thread:$0]  %s2, 128, %s38, [#allocation6]
    $region13: #{tpu_custom_call.1} parent=1 // pred_fallthru
      _
    // Predicated region
    $region14: #{tpu_custom_call.1} parent=1 // pred_check
      _
    $region15: #{tpu_custom_call.1} parent=1 // pred_check_branch
      %42 = sbr.rel (0) target = $region17
    $region16: #{tpu_custom_call.1} parent=1 // pred_region
      %43 = dma.done [#allocation3], 256
    $region17: #{tpu_custom_call.1} parent=1 // pred_fallthru
      _
    // Predicated region
    $region18: #{tpu_custom_call.1} parent=1 // pred_check
      _
    $region19: #{tpu_custom_call.1} parent=1 // pred_check_branch
      %45 = sbr.rel (0) target = $region21
    $region20: #{tpu_custom_call.1} parent=1 // pred_region
      %46 = dma.done [#allocation6], 128
    $region21: #{tpu_custom_call.1} parent=1 // pred_fallthru
      _
    // Predicated region
    $region22: #{tpu_custom_call.1} parent=1 // pred_check
      _
    $region23: #{tpu_custom_call.1} parent=1 // pred_check_branch
      %48 = sbr.rel (0) target = $region25
    $region24: #{tpu_custom_call.1} parent=1 // pred_region
      %49 = dma.done [#allocation6], 128
    $region25: #{tpu_custom_call.1} parent=1 // pred_fallthru
      _
    %v50 = vld [vmem:[#allocation2] sm:$0xff]
    %v51 = vld [vmem:[#allocation2 + $0x8] sm:$0xff]
    %v54 = vcombine.high %v50, %v50
    %v56 = vunpack.c.l.s4 1983009808
    %v57 = vunpack.c.0.s8 %v56
    %v58 = vlaneseq
    %v59 = vshrl.u32 %v58, 7
    %v60 = vsub.s32 %v57, %v59
    %v61 = vrot.slane %v50, %v60
    %v63 = vunpack.c.l.s4 1983009808
    %v64 = vunpack.c.0.s8 %v63
    %v65 = vlaneseq
    %v66 = vshrl.u32 %v65, 7
    %v67 = vsub.s32 %v64, %v66
    %v68 = vrot.slane %v54, %v67
    %v69 = vcombine.high %v61, %v61
    %v70 = vcombine.high %v68, %v68
    %v71 = vcombine.high %v51, %v51
    %v73 = vunpack.c.l.s4 1983009808
    %v74 = vunpack.c.0.s8 %v73
    %v75 = vlaneseq
    %v76 = vshrl.u32 %v75, 7
    %v77 = vsub.s32 %v74, %v76
    %v78 = vrot.slane %v51, %v77
    %v80 = vunpack.c.l.s4 1983009808
    %v81 = vunpack.c.0.s8 %v80
    %v82 = vlaneseq
    %v83 = vshrl.u32 %v82, 7
    %v84 = vsub.s32 %v81, %v83
    %v85 = vrot.slane %v71, %v84
    %v86 = vcombine.high %v78, %v78
    %v87 = vcombine.high %v85, %v85
    %vm96 = vcmask 1041408
    %v97 = vsel %vm96, %v61, 0.0
    %v98 = vsel %vm96, %v69, 0.0
    %v99 = vadd.f32 %v97, %v98
    %v100 = vsel %vm96, %v68, 0.0
    %v101 = vadd.f32 %v99, %v100
    %v102 = vsel %vm96, %v70, 0.0
    %v103 = vadd.f32 %v101, %v102
    %v104 = vsel %vm96, %v78, 0.0
    %v105 = vadd.f32 %v103, %v104
    %v106 = vsel %vm96, %v86, 0.0
    %v107 = vadd.f32 %v105, %v106
    %v108 = vsel %vm96, %v85, 0.0
    %v109 = vadd.f32 %v107, %v108
    %v110 = vsel %vm96, %v87, 0.0
    %v111 = vadd.f32 %v109, %v110
    %112 = vadd.xlane.f32.xlu0 %v111
    %v113 = vpop.xlane.xlu0 %112
    %v114 = vmul.f32 %v113, 0.0009765625
    %v117 = vunpack.c.l.s4 269488144
    %v118 = vunpack.c.0.s8 %v117
    %v119 = vlaneseq
    %v120 = vshrl.u32 %v119, 7
    %v121 = vsub.s32 %v118, %v120
    %v122 = vrot.slane %v114, %v121
    %v124 = vsub.f32 %v50, %v122
    %v125 = vsub.f32 %v51, %v122
    %v126 = vmul.f32 %v124, %v124
    %v127 = vmul.f32 %v125, %v125
    %v130 = vcombine.high %v126, %v126
    %v132 = vunpack.c.l.s4 1983009808
    %v133 = vunpack.c.0.s8 %v132
    %v134 = vlaneseq
    %v135 = vshrl.u32 %v134, 7
    %v136 = vsub.s32 %v133, %v135
    %v137 = vrot.slane %v126, %v136
    %v139 = vunpack.c.l.s4 1983009808
    %v140 = vunpack.c.0.s8 %v139
    %v141 = vlaneseq
    %v142 = vshrl.u32 %v141, 7
    %v143 = vsub.s32 %v140, %v142
    %v144 = vrot.slane %v130, %v143
    %v145 = vcombine.high %v137, %v137
    %v146 = vcombine.high %v144, %v144
    %v147 = vcombine.high %v127, %v127
    %v149 = vunpack.c.l.s4 1983009808
    %v150 = vunpack.c.0.s8 %v149
    %v151 = vlaneseq
    %v152 = vshrl.u32 %v151, 7
    %v153 = vsub.s32 %v150, %v152
    %v154 = vrot.slane %v127, %v153
    %v156 = vunpack.c.l.s4 1983009808
    %v157 = vunpack.c.0.s8 %v156
    %v158 = vlaneseq
    %v159 = vshrl.u32 %v158, 7
    %v160 = vsub.s32 %v157, %v159
    %v161 = vrot.slane %v147, %v160
    %v162 = vcombine.high %v154, %v154
    %v163 = vcombine.high %v161, %v161
    %v172 = vsel %vm96, %v137, 0.0
    %v173 = vsel %vm96, %v145, 0.0
    %v174 = vadd.f32 %v172, %v173
    %v175 = vsel %vm96, %v144, 0.0
    %v176 = vadd.f32 %v174, %v175
    %v177 = vsel %vm96, %v146, 0.0
    %v178 = vadd.f32 %v176, %v177
    %v179 = vsel %vm96, %v154, 0.0
    %v180 = vadd.f32 %v178, %v179
    %v181 = vsel %vm96, %v162, 0.0
    %v182 = vadd.f32 %v180, %v181
    %v183 = vsel %vm96, %v161, 0.0
    %v184 = vadd.f32 %v182, %v183
    %v185 = vsel %vm96, %v163, 0.0
    %v186 = vadd.f32 %v184, %v185
    %187 = vadd.xlane.f32.xlu0 %v186
    %v188 = vpop.xlane.xlu0 %187
    %v189 = vmul.f32 %v188, 0.0009765625
    %v190 = vadd.f32 %v189, 1e-05
    %v191 = vrsqrt.pop %v190
    %v194 = vunpack.c.l.s4 269488144
    %v195 = vunpack.c.0.s8 %v194
    %v196 = vlaneseq
    %v197 = vshrl.u32 %v196, 7
    %v198 = vsub.s32 %v195, %v197
    %v199 = vrot.slane %v191, %v198
    %v201 = vmul.f32 %v124, %v199
    %v202 = vmul.f32 %v125, %v199
    %v203 = vld [vmem:[#allocation5] sm:$0xff]
    %v205 = vlaneseq
    %v206 = vshrl.u32 %v205, 7
    %v207 = vsub.s32 0, %v206
    %v208 = vrot.slane %v203, %v207
    %v209 = vlaneseq
    %v210 = vshrl.u32 %v209, 7
    %v211 = vsub.s32 1, %v210
    %v212 = vrot.slane %v203, %v211
    %v213 = vlaneseq
    %v214 = vshrl.u32 %v213, 7
    %v215 = vsub.s32 2, %v214
    %v216 = vrot.slane %v203, %v215
    %v217 = vlaneseq
    %v218 = vshrl.u32 %v217, 7
    %v219 = vsub.s32 3, %v218
    %v220 = vrot.slane %v203, %v219
    %v221 = vlaneseq
    %v222 = vshrl.u32 %v221, 7
    %v223 = vsub.s32 4, %v222
    %v224 = vrot.slane %v203, %v223
    %v225 = vlaneseq
    %v226 = vshrl.u32 %v225, 7
    %v227 = vsub.s32 5, %v226
    %v228 = vrot.slane %v203, %v227
    %v229 = vlaneseq
    %v230 = vshrl.u32 %v229, 7
    %v231 = vsub.s32 6, %v230
    %v232 = vrot.slane %v203, %v231
    %v233 = vlaneseq
    %v234 = vshrl.u32 %v233, 7
    %v235 = vsub.s32 7, %v234
    %v236 = vrot.slane %v203, %v235
    %v237 = vcombine.low %v208, %v212
    %v238 = vcombine.low %v216, %v220
    %v240 = vunpack.c.l.s4 1983009808
    %v241 = vunpack.c.0.s8 %v240
    %v242 = vlaneseq
    %v243 = vshrl.u32 %v242, 7
    %v244 = vsub.s32 %v241, %v243
    %v245 = vrot.slane %v237, %v244
    %v247 = vunpack.c.l.s4 1983009808
    %v248 = vunpack.c.0.s8 %v247
    %v249 = vlaneseq
    %v250 = vshrl.u32 %v249, 7
    %v251 = vsub.s32 %v248, %v250
    %v252 = vrot.slane %v238, %v251
    %v253 = vcombine.low %v245, %v252
    %v254 = vcombine.low %v224, %v228
    %v255 = vcombine.low %v232, %v236
    %v257 = vunpack.c.l.s4 1983009808
    %v258 = vunpack.c.0.s8 %v257
    %v259 = vlaneseq
    %v260 = vshrl.u32 %v259, 7
    %v261 = vsub.s32 %v258, %v260
    %v262 = vrot.slane %v254, %v261
    %v264 = vunpack.c.l.s4 1983009808
    %v265 = vunpack.c.0.s8 %v264
    %v266 = vlaneseq
    %v267 = vshrl.u32 %v266, 7
    %v268 = vsub.s32 %v265, %v267
    %v269 = vrot.slane %v255, %v268
    %v270 = vcombine.low %v262, %v269
    %v273 = vmul.f32 %v201, %v253
    %v274 = vmul.f32 %v202, %v270
    %v275 = vld [vmem:[#allocation7] sm:$0xff]
    %v277 = vlaneseq
    %v278 = vshrl.u32 %v277, 7
    %v279 = vsub.s32 0, %v278
    %v280 = vrot.slane %v275, %v279
    %v281 = vlaneseq
    %v282 = vshrl.u32 %v281, 7
    %v283 = vsub.s32 1, %v282
    %v284 = vrot.slane %v275, %v283
    %v285 = vlaneseq
    %v286 = vshrl.u32 %v285, 7
    %v287 = vsub.s32 2, %v286
    %v288 = vrot.slane %v275, %v287
    %v289 = vlaneseq
    %v290 = vshrl.u32 %v289, 7
    %v291 = vsub.s32 3, %v290
    %v292 = vrot.slane %v275, %v291
    %v293 = vlaneseq
    %v294 = vshrl.u32 %v293, 7
    %v295 = vsub.s32 4, %v294
    %v296 = vrot.slane %v275, %v295
    %v297 = vlaneseq
    %v298 = vshrl.u32 %v297, 7
    %v299 = vsub.s32 5, %v298
    %v300 = vrot.slane %v275, %v299
    %v301 = vlaneseq
    %v302 = vshrl.u32 %v301, 7
    %v303 = vsub.s32 6, %v302
    %v304 = vrot.slane %v275, %v303
    %v305 = vlaneseq
    %v306 = vshrl.u32 %v305, 7
    %v307 = vsub.s32 7, %v306
    %v308 = vrot.slane %v275, %v307
    %v309 = vcombine.low %v280, %v284
    %v310 = vcombine.low %v288, %v292
    %v312 = vunpack.c.l.s4 1983009808
    %v313 = vunpack.c.0.s8 %v312
    %v314 = vlaneseq
    %v315 = vshrl.u32 %v314, 7
    %v316 = vsub.s32 %v313, %v315
    %v317 = vrot.slane %v309, %v316
    %v319 = vunpack.c.l.s4 1983009808
    %v320 = vunpack.c.0.s8 %v319
    %v321 = vlaneseq
    %v322 = vshrl.u32 %v321, 7
    %v323 = vsub.s32 %v320, %v322
    %v324 = vrot.slane %v310, %v323
    %v325 = vcombine.low %v317, %v324
    %v326 = vcombine.low %v296, %v300
    %v327 = vcombine.low %v304, %v308
    %v329 = vunpack.c.l.s4 1983009808
    %v330 = vunpack.c.0.s8 %v329
    %v331 = vlaneseq
    %v332 = vshrl.u32 %v331, 7
    %v333 = vsub.s32 %v330, %v332
    %v334 = vrot.slane %v326, %v333
    %v336 = vunpack.c.l.s4 1983009808
    %v337 = vunpack.c.0.s8 %v336
    %v338 = vlaneseq
    %v339 = vshrl.u32 %v338, 7
    %v340 = vsub.s32 %v337, %v339
    %v341 = vrot.slane %v327, %v340
    %v342 = vcombine.low %v334, %v341
    %v345 = vadd.f32 %v273, %v325
    %v346 = vadd.f32 %v274, %v342
    %347 = vst [vmem:[#allocation8] sm:$0xff] %v345
    %348 = vst [vmem:[#allocation8 + $0x8] sm:$0xff] %v346
    // Predicated region
    $region26: #{tpu_custom_call.1} parent=1 // pred_check
      _
    $region27: #{tpu_custom_call.1} parent=1 // pred_check_branch
      %350 = sbr.rel (0) target = $region29
    $region28: #{tpu_custom_call.1} parent=1 // pred_region
      %s352 = ssub.s32 256, 256
      %353 = vsyncadd [#allocation4], %s352
      %s355 = sshll.u32 [#allocation8], 4
      %s356 = int_to_ptr.vmem [resolvable:$true] %s355
      %358 = dma.vmem_to_hbm [thread:$0]  %s356, 256, %s3, [#allocation4]
    $region29: #{tpu_custom_call.1} parent=1 // pred_fallthru
      _
    // Predicated region
    $region30: #{tpu_custom_call.1} parent=1 // pred_check
      _
    $region31: #{tpu_custom_call.1} parent=1 // pred_check_branch
      %360 = sbr.rel (0) target = $region33
    $region32: #{tpu_custom_call.1} parent=1 // pred_region
      %361 = dma.done [#allocation4], 256
    $region33: #{tpu_custom_call.1} parent=1 // pred_fallthru
      _
    %362 = vsyncpa [#allocation3], 1
    %363 = vsyncpa [#allocation6], 1
    %364 = vsyncpa [#allocation4], 1

</llo_original>
